<compile_context>
chip_gen: v7x
topology: tpu7x:2x2x1
jax: 0.10.0
libtpu: 0.0.40
codegen_flags: <defaults>
</compile_context>

<pallas_src>
import jax
import jax.numpy as jnp
from jax.experimental import pallas as pl
from jax.experimental.pallas import tpu as pltpu


def _round_up(n, m):
    return ((n + m - 1) // m) * m


def _make_kernel(n_linear):
    """Builds the fused MLP+softmax kernel for `n_linear` Linear layers."""

    def kernel(*refs):
        x_ref = refs[0]
        o_ref = refs[-1]
        wb_refs = refs[1:-1]  # w0, b0, w1, b1, ...

        # bf16 activations feed the MXU; accumulate in f32 via preferred_element_type.
        h = x_ref[...].astype(jnp.bfloat16)
        logits = None
        for li in range(n_linear):
            w = wb_refs[2 * li][...]          # (in, out) bf16
            b = wb_refs[2 * li + 1][...]      # (1, out)  f32
            z = jnp.dot(h, w, preferred_element_type=jnp.float32) + b
            if li < n_linear - 1:
                # ReLU; Dropout is identity in eval mode.
                h = jnp.maximum(z, 0.0).astype(jnp.bfloat16)
            else:
                logits = z

        # Softmax(dim=1) in f32 with an exact divide so rows sum to 1 to float precision.
        m = jnp.max(logits, axis=-1, keepdims=True)
        e = jnp.exp(logits - m)
        o_ref[...] = e / jnp.sum(e, axis=-1, keepdims=True)

    return kernel


def prepare_params(params_f32):
    """One-time prep: weights -> bf16 (MXU), biases -> f32 row vectors (1, out)."""
    prepared = []
    for w, b in params_f32:
        prepared.append((jnp.asarray(w, jnp.bfloat16),
                         jnp.asarray(b, jnp.float32).reshape(1, -1)))
    return prepared


def intent_classifier_forward(x, prepared_params, *, batch_tile=2048):
    """Forward pass. x: (B, input_size) f32. prepared_params: list of (w_bf16, b_f32)."""
    B, D_in = x.shape
    D_out = prepared_params[-1][0].shape[1]
    n_linear = len(prepared_params)

    # ---- batch tile selection ----
    n_steps = max(1, pl.cdiv(B, batch_tile))
    if B >= 512:
        # v7x has 2 TensorCores; give the "parallel" grid axis at least 2 steps to shard.
        n_steps = max(2, n_steps)
    bt = _round_up(pl.cdiv(B, n_steps), 8)   # f32 input -> sublane multiple of 8 suffices
    B_pad = bt * n_steps
    if B_pad != B:
        x = jnp.pad(x, ((0, B_pad - B), (0, 0)))

    # ---- specs: x is batch-tiled, weights/biases are fully resident every step ----
    in_specs = [pl.BlockSpec((bt, D_in), lambda i: (i, 0))]
    flat_inputs = [x]
    for w, b in prepared_params:
        in_specs.append(pl.BlockSpec(w.shape, lambda i: (0, 0)))
        in_specs.append(pl.BlockSpec(b.shape, lambda i: (0, 0)))
        flat_inputs.extend([w, b])

    out = pl.pallas_call(
        _make_kernel(n_linear),
        out_shape=jax.ShapeDtypeStruct((B_pad, D_out), jnp.float32),
        grid=(n_steps,),
        in_specs=in_specs,
        out_specs=pl.BlockSpec((bt, D_out), lambda i: (i, 0)),
        compiler_params=pltpu.CompilerParams(
            dimension_semantics=("parallel",)),
    )(*flat_inputs)

    if B_pad != B:
        out = out[:B]
    return out


def init_params(key, input_size, output_size, layer_config):
    """Deterministic init mimicking nn.Linear default (uniform +/- 1/sqrt(fan_in))."""
    dims = [input_size] + [c[0] for c in layer_config] + [output_size]
    params = []
    for din, dout in zip(dims[:-1], dims[1:]):
        key, kw, kb = jax.random.split(key, 3)
        bound = 1.0 / (din ** 0.5)
        w = jax.random.uniform(kw, (din, dout), jnp.float32, -bound, bound)
        b = jax.random.uniform(kb, (1, dout), jnp.float32, -bound, bound)
        params.append((w, b))
    return params


def reference_forward(x, params_f32):
    """Exact f32 reference matching the PyTorch module in eval mode."""
    h = x
    for li, (w, b) in enumerate(params_f32):
        h = h @ w + b
        if li < len(params_f32) - 1:
            h = jnp.maximum(h, 0.0)
    return jax.nn.softmax(h, axis=1)


if __name__ == "__main__":
    # Shapes consistent with the module: input_size=32, layer_config=[(64,0.2),(32,0.3)], output_size=8
    input_size = 32
    output_size = 8
    layer_config = [(64, 0.2), (32, 0.3)]

    key = jax.random.PRNGKey(0)
    key, kx = jax.random.split(key)
    params = init_params(key, input_size, output_size, layer_config)
    prepared = prepare_params(params)  # one-time weight cast (not per forward call)

    # Case 1: small batch, multiple of 8 (no padding / slicing).
    batch = 64
    x = jax.random.normal(kx, (batch, input_size), dtype=jnp.float32)
    out = jax.block_until_ready(intent_classifier_forward(x, prepared))
    ref = reference_forward(x, params)
    assert out.shape == (batch, output_size)
    # bf16 matmuls vs exact f32 reference -> loosened elementwise tolerance.
    assert jnp.allclose(out, ref, atol=2e-2, rtol=2e-2), "mismatch vs reference (batch=64)"
    # Exact f32 divide -> rows sum to 1 to float precision.
    assert jnp.allclose(jnp.sum(out, axis=1), jnp.ones((batch,)), atol=1e-3)

    # Case 2: batch not a multiple of the sublane group (exercises padding + row-slice path).
    batch2 = 10
    x2 = jax.random.normal(jax.random.PRNGKey(1), (batch2, input_size), dtype=jnp.float32)
    out2 = jax.block_until_ready(intent_classifier_forward(x2, prepared))
    ref2 = reference_forward(x2, params)
    assert out2.shape == (batch2, output_size)
    assert jnp.allclose(out2, ref2, atol=2e-2, rtol=2e-2), "mismatch vs reference (batch=10)"
    assert jnp.allclose(jnp.sum(out2, axis=1), jnp.ones((batch2,)), atol=1e-3)

    # TODO(synk): nn.Dropout in training mode (random masking) is not implemented; the kernel
    # matches eval-mode semantics (dropout = identity), same as the original forward at inference.
    print("KERNEL_OK")
</pallas_src>

<mosaic_0001>
module attributes {stable_mosaic.version = 11 : i64} {
  func.func @kernel(%arg0: i32, %arg1: memref<64x32xf32, #tpu.memory_space<vmem>>, %arg2: memref<32x64xbf16, #tpu.memory_space<vmem>>, %arg3: memref<1x64xf32, #tpu.memory_space<vmem>>, %arg4: memref<64x32xbf16, #tpu.memory_space<vmem>>, %arg5: memref<1x32xf32, #tpu.memory_space<vmem>>, %arg6: memref<32x8xbf16, #tpu.memory_space<vmem>>, %arg7: memref<1x8xf32, #tpu.memory_space<vmem>>, %arg8: memref<64x8xf32, #tpu.memory_space<vmem>>) attributes {dimension_semantics = [#tpu.dimension_semantics<parallel>], iteration_bounds = array<i64: 1>, scalar_prefetch = 0 : i64, scratch_operands = 0 : i64, tpu.core_type = #tpu.core_type<tc>, window_params = [{transform_indices = @transform_0, window_bounds = array<i64: 64, 32>}, {pipeline_mode = #tpu.pipeline_mode<synchronous>, transform_indices = @transform_1, window_bounds = array<i64: 32, 64>}, {pipeline_mode = #tpu.pipeline_mode<synchronous>, transform_indices = @transform_2, window_bounds = array<i64: 1, 64>}, {pipeline_mode = #tpu.pipeline_mode<synchronous>, transform_indices = @transform_3, window_bounds = array<i64: 64, 32>}, {pipeline_mode = #tpu.pipeline_mode<synchronous>, transform_indices = @transform_4, window_bounds = array<i64: 1, 32>}, {pipeline_mode = #tpu.pipeline_mode<synchronous>, transform_indices = @transform_5, window_bounds = array<i64: 32, 8>}, {pipeline_mode = #tpu.pipeline_mode<synchronous>, transform_indices = @transform_6, window_bounds = array<i64: 1, 8>}, {transform_indices = @transform_7, window_bounds = array<i64: 64, 8>}]} {
    %c0 = arith.constant 0 : index
    %c0_0 = arith.constant 0 : index
    %0 = vector.load %arg1[%c0, %c0_0] : memref<64x32xf32, #tpu.memory_space<vmem>>, vector<64x32xf32>
    %1 = arith.truncf %0 : vector<64x32xf32> to vector<64x32xbf16>
    %c0_1 = arith.constant 0 : index
    %c0_2 = arith.constant 0 : index
    %2 = vector.load %arg2[%c0_1, %c0_2] : memref<32x64xbf16, #tpu.memory_space<vmem>>, vector<32x64xbf16>
    %c0_3 = arith.constant 0 : index
    %c0_4 = arith.constant 0 : index
    %3 = vector.load %arg3[%c0_3, %c0_4] : memref<1x64xf32, #tpu.memory_space<vmem>>, vector<1x64xf32>
    %cst = arith.constant dense<0.000000e+00> : vector<64x64xf32>
    %4 = tpu.matmul %1, %2, %cst {dimension_numbers = #tpu.dot_dimension_numbers<[1], [0], [0], [1], [0, 0, 1, 1], [], []>} : vector<64x32xbf16>, vector<32x64xbf16>, vector<64x64xf32> -> vector<64x64xf32>
    %5 = vector.broadcast %3 : vector<1x64xf32> to vector<64x64xf32>
    %6 = arith.addf %4, %5 : vector<64x64xf32>
    %cst_5 = arith.constant 0.000000e+00 : f32
    %7 = vector.broadcast %cst_5 : f32 to vector<64x64xf32>
    %8 = arith.maximumf %6, %7 : vector<64x64xf32>
    %9 = arith.truncf %8 : vector<64x64xf32> to vector<64x64xbf16>
    %c0_6 = arith.constant 0 : index
    %c0_7 = arith.constant 0 : index
    %10 = vector.load %arg4[%c0_6, %c0_7] : memref<64x32xbf16, #tpu.memory_space<vmem>>, vector<64x32xbf16>
    %c0_8 = arith.constant 0 : index
    %c0_9 = arith.constant 0 : index
    %11 = vector.load %arg5[%c0_8, %c0_9] : memref<1x32xf32, #tpu.memory_space<vmem>>, vector<1x32xf32>
    %cst_10 = arith.constant dense<0.000000e+00> : vector<64x32xf32>
    %12 = tpu.matmul %9, %10, %cst_10 {dimension_numbers = #tpu.dot_dimension_numbers<[1], [0], [0], [1], [0, 0, 1, 1], [], []>} : vector<64x64xbf16>, vector<64x32xbf16>, vector<64x32xf32> -> vector<64x32xf32>
    %13 = vector.broadcast %11 : vector<1x32xf32> to vector<64x32xf32>
    %14 = arith.addf %12, %13 : vector<64x32xf32>
    %cst_11 = arith.constant 0.000000e+00 : f32
    %15 = vector.broadcast %cst_11 : f32 to vector<64x32xf32>
    %16 = arith.maximumf %14, %15 : vector<64x32xf32>
    %17 = arith.truncf %16 : vector<64x32xf32> to vector<64x32xbf16>
    %c0_12 = arith.constant 0 : index
    %c0_13 = arith.constant 0 : index
    %18 = vector.load %arg6[%c0_12, %c0_13] : memref<32x8xbf16, #tpu.memory_space<vmem>>, vector<32x8xbf16>
    %c0_14 = arith.constant 0 : index
    %c0_15 = arith.constant 0 : index
    %19 = vector.load %arg7[%c0_14, %c0_15] : memref<1x8xf32, #tpu.memory_space<vmem>>, vector<1x8xf32>
    %cst_16 = arith.constant dense<0.000000e+00> : vector<64x8xf32>
    %20 = tpu.matmul %17, %18, %cst_16 {dimension_numbers = #tpu.dot_dimension_numbers<[1], [0], [0], [1], [0, 0, 1, 1], [], []>} : vector<64x32xbf16>, vector<32x8xbf16>, vector<64x8xf32> -> vector<64x8xf32>
    %21 = vector.broadcast %19 : vector<1x8xf32> to vector<64x8xf32>
    %22 = arith.addf %20, %21 : vector<64x8xf32>
    %cst_17 = arith.constant dense<0xFF800000> : vector<64xf32>
    %23 = vector.multi_reduction <maximumf>, %22, %cst_17 [1] : vector<64x8xf32> to vector<64xf32>
    %24 = vector.shape_cast %23 : vector<64xf32> to vector<64x1xf32>
    %25 = vector.broadcast %24 : vector<64x1xf32> to vector<64x8xf32>
    %26 = arith.subf %22, %25 : vector<64x8xf32>
    %27 = math.exp %26 : vector<64x8xf32>
    %cst_18 = arith.constant dense<0.000000e+00> : vector<64xf32>
    %28 = vector.multi_reduction <add>, %27, %cst_18 [1] : vector<64x8xf32> to vector<64xf32>
    %29 = vector.shape_cast %28 : vector<64xf32> to vector<64x1xf32>
    %30 = vector.broadcast %29 : vector<64x1xf32> to vector<64x8xf32>
    %31 = arith.divf %27, %30 : vector<64x8xf32>
    %c0_19 = arith.constant 0 : index
    %c0_20 = arith.constant 0 : index
    %32 = vector.load %arg8[%c0_19, %c0_20] : memref<64x8xf32, #tpu.memory_space<vmem>>, vector<64x8xf32>
    tpu.vector_store %arg8[%c0_19, %c0_20], %31 {strides = array<i32>} : memref<64x8xf32, #tpu.memory_space<vmem>>, vector<64x8xf32>,
    return
  }
  func.func @transform_0(%arg0: i32) -> (i32, i32) {
    %c0_i32 = arith.constant 0 : i32
    %c0_i32_0 = arith.constant 0 : i32
    return %arg0, %c0_i32 : i32, i32
  }
  func.func @transform_1(%arg0: i32) -> (i32, i32) {
    %c0_i32 = arith.constant 0 : i32
    %c0_i32_0 = arith.constant 0 : i32
    %c0_i32_1 = arith.constant 0 : i32
    return %c0_i32, %c0_i32_0 : i32, i32
  }
  func.func @transform_2(%arg0: i32) -> (i32, i32) {
    %c0_i32 = arith.constant 0 : i32
    %c0_i32_0 = arith.constant 0 : i32
    %c0_i32_1 = arith.constant 0 : i32
    return %c0_i32, %c0_i32_0 : i32, i32
  }
  func.func @transform_3(%arg0: i32) -> (i32, i32) {
    %c0_i32 = arith.constant 0 : i32
    %c0_i32_0 = arith.constant 0 : i32
    %c0_i32_1 = arith.constant 0 : i32
    return %c0_i32, %c0_i32_0 : i32, i32
  }
  func.func @transform_4(%arg0: i32) -> (i32, i32) {
    %c0_i32 = arith.constant 0 : i32
    %c0_i32_0 = arith.constant 0 : i32
    %c0_i32_1 = arith.constant 0 : i32
    return %c0_i32, %c0_i32_0 : i32, i32
  }
  func.func @transform_5(%arg0: i32) -> (i32, i32) {
    %c0_i32 = arith.constant 0 : i32
    %c0_i32_0 = arith.constant 0 : i32
    %c0_i32_1 = arith.constant 0 : i32
    return %c0_i32, %c0_i32_0 : i32, i32
  }
  func.func @transform_6(%arg0: i32) -> (i32, i32) {
    %c0_i32 = arith.constant 0 : i32
    %c0_i32_0 = arith.constant 0 : i32
    %c0_i32_1 = arith.constant 0 : i32
    return %c0_i32, %c0_i32_0 : i32, i32
  }
  func.func @transform_7(%arg0: i32) -> (i32, i32) {
    %c0_i32 = arith.constant 0 : i32
    %c0_i32_0 = arith.constant 0 : i32
    return %arg0, %c0_i32 : i32, i32
  }
}

</mosaic_0001>

<llo_original>
// kernel: tpu_custom_call.1
$region0: #{tpu_custom_call.1}
  #allocation0 [shape = 'u32[]', space=smem, size = 0x4, offset = 0x4, fixed_abs, tag = 'smem constant byte address 0x4 - core index']
  #allocation1 [shape = 'u32[144,128]{1,0:T(1,128)}', space=vmem, size = 0x12000, scoped, tag = 'internal scratch']
  %s0 = inlined_call_operand.vmem [shape: f32[64,32], index: 0, kind: input, shape index: {}]
  %s1 = inlined_call_operand.vmem [shape: bf16[32,64], index: 1, kind: input, shape index: {}]
  %s2 = inlined_call_operand.vmem [shape: f32[1,64], index: 2, kind: input, shape index: {}]
  %s3 = inlined_call_operand.vmem [shape: bf16[64,32], index: 3, kind: input, shape index: {}]
  %s4 = inlined_call_operand.vmem [shape: f32[1,32], index: 4, kind: input, shape index: {}]
  %s5 = inlined_call_operand.vmem [shape: bf16[32,8], index: 5, kind: input, shape index: {}]
  %s6 = inlined_call_operand.vmem [shape: f32[1,8], index: 6, kind: input, shape index: {}]
  %s7 = inlined_call_operand.vmem [shape: f32[64,8], index: 7, kind: output, shape index: {}]
  %s8 = sld [smem:[#allocation0]]
  $region38: #{tpu_custom_call.1} parent=0
    _
  %s10 = ssub.s32 1, %s8
  %s11 = scalar_select 0, %s10, %s8
  // Predicated region
  $region2: #{tpu_custom_call.1} parent=0 // pred_check
    _
  $region3: #{tpu_custom_call.1} parent=0 // pred_check_branch
    %13 = sbr.rel (0) target = $region5
  $region4: #{tpu_custom_call.1} parent=0 // pred_region
    _
  $region5: #{tpu_custom_call.1} parent=0 // pred_fallthru
    _
  // Predicated region
  $region6: #{tpu_custom_call.1} parent=0 // pred_check
    _
  $region7: #{tpu_custom_call.1} parent=0 // pred_check_branch
    %15 = sbr.rel (0) target = $region9
  $region8: #{tpu_custom_call.1} parent=0 // pred_region
    _
  $region9: #{tpu_custom_call.1} parent=0 // pred_fallthru
    _
  // Predicated region
  $region10: #{tpu_custom_call.1} parent=0 // pred_check
    _
  $region11: #{tpu_custom_call.1} parent=0 // pred_check_branch
    %17 = sbr.rel (0) target = $region13
  $region12: #{tpu_custom_call.1} parent=0 // pred_region
    _
  $region13: #{tpu_custom_call.1} parent=0 // pred_fallthru
    _
  // Predicated region
  $region14: #{tpu_custom_call.1} parent=0 // pred_check
    _
  $region15: #{tpu_custom_call.1} parent=0 // pred_check_branch
    %19 = sbr.rel (0) target = $region17
  $region16: #{tpu_custom_call.1} parent=0 // pred_region
    _
  $region17: #{tpu_custom_call.1} parent=0 // pred_fallthru
    _
  // Predicated region
  $region18: #{tpu_custom_call.1} parent=0 // pred_check
    _
  $region19: #{tpu_custom_call.1} parent=0 // pred_check_branch
    %21 = sbr.rel (0) target = $region21
  $region20: #{tpu_custom_call.1} parent=0 // pred_region
    _
  $region21: #{tpu_custom_call.1} parent=0 // pred_fallthru
    _
  // Predicated region
  $region22: #{tpu_custom_call.1} parent=0 // pred_check
    _
  $region23: #{tpu_custom_call.1} parent=0 // pred_check_branch
    %23 = sbr.rel (0) target = $region25
  $region24: #{tpu_custom_call.1} parent=0 // pred_region
    _
  $region25: #{tpu_custom_call.1} parent=0 // pred_fallthru
    _
  // Predicated region
  $region26: #{tpu_custom_call.1} parent=0 // pred_check
    _
  $region27: #{tpu_custom_call.1} parent=0 // pred_check_branch
    %25 = sbr.rel (0) target = $region29
  $region28: #{tpu_custom_call.1} parent=0 // pred_region
    _
  $region29: #{tpu_custom_call.1} parent=0 // pred_fallthru
    _
  %v27 = vld [vmem:[%s0] sm:$0xff]
  %v28 = vld [vmem:[%s0 + $0x8] sm:$0xff]
  %v29 = vld [vmem:[%s0 + $0x10] sm:$0xff]
  %v30 = vld [vmem:[%s0 + $0x18] sm:$0xff]
  %v31 = vld [vmem:[%s0 + $0x20] sm:$0xff]
  %v32 = vld [vmem:[%s0 + $0x28] sm:$0xff]
  %v33 = vld [vmem:[%s0 + $0x30] sm:$0xff]
  %v34 = vld [vmem:[%s0 + $0x38] sm:$0xff]
  %v35 = vpack.c.bf16 %v28, %v27
  %v36 = vpack.c.bf16 %v30, %v29
  %v37 = vpack.c.bf16 %v32, %v31
  %v38 = vpack.c.bf16 %v34, %v33
  %v39 = vld [vmem:[%s1] sm:$0xf]
  %v40 = vld [vmem:[%s1 + $0x4] sm:$0xf]
  %v41 = vld [vmem:[%s1 + $0x8] sm:$0xf]
  %v42 = vld [vmem:[%s1 + $0xc] sm:$0xf]
  %v43 = vld [vmem:[%s2] sm:$0x1]
  %v45 = vlaneseq
  %v46 = vshrl.u32 %v45, 7
  %v47 = vsub.s32 0, %v46
  %v48 = vrot.slane %v43, %v47
  %v54 = vunpack.c.l.b16 %v39
  %v55 = vunpack.c.l.b16 %v40
  %v56 = vunpack.c.l.b16 %v41
  %v57 = vunpack.c.l.b16 %v42
  %v58 = vpack.c.b16 %v55, %v54
  %v59 = vpack.c.b16 %v57, %v56
  %vm62 = vcmask 261120
  %v64 = vsel %vm62, %v35, 0
  %v67 = vsel %vm62, %v36, 0
  %v70 = vsel %vm62, %v37, 0
  %v73 = vsel %vm62, %v38, 0
  %75 = vmatprep.subr.bf16.mxu0 0
  %76 = vmatpush1.bf16.msra.mxu0 %v58
  %77 = vmatprep.subr.bf16.mxu0 0
  %78 = vmatpush1.bf16.msra.mxu0 %v59
  %79 = vmatprep.subr.bf16.mxu0 0
  %80 = vmatpush1.bf16.msra.mxu0 0
  %81 = vmatprep.subr.bf16.mxu0 0
  %82 = vmatpush1.bf16.msra.mxu0 0
  %83 = vmatprep.subr.bf16.mxu0 0
  %84 = vmatpush1.bf16.msra.mxu0 0
  %85 = vmatprep.subr.bf16.mxu0 0
  %86 = vmatpush1.bf16.msra.mxu0 0
  %87 = vmatprep.subr.bf16.mxu0 0
  %88 = vmatpush1.bf16.msra.mxu0 0
  %89 = vmatprep.subr.bf16.mxu0 0
  %90 = vmatpush1.bf16.msra.mxu0 0
  %91 = vmatprep.subr.bf16.mxu0 0
  %92 = vmatpush1.bf16.msra.mxu0 0
  %93 = vmatprep.subr.bf16.mxu0 0
  %94 = vmatpush1.bf16.msra.mxu0 0
  %95 = vmatprep.subr.bf16.mxu0 0
  %96 = vmatpush1.bf16.msra.mxu0 0
  %97 = vmatprep.subr.bf16.mxu0 0
  %98 = vmatpush1.bf16.msra.mxu0 0
  %99 = vmatprep.subr.bf16.mxu0 0
  %100 = vmatpush1.bf16.msra.mxu0 0
  %101 = vmatprep.subr.bf16.mxu0 0
  %102 = vmatpush1.bf16.msra.mxu0 0
  %103 = vmatprep.subr.bf16.mxu0 0
  %104 = vmatpush1.bf16.msra.mxu0 0
  %105 = vmatprep.subr.bf16.mxu0 0
  %106 = vmatpush1.bf16.msra.mxu0 0
  %107 = vmatprep.mubr.bf16.mxu0 0
  %108 = vmatmul.mubr.bf16.gmra.mrb[0].mxu0 %v64
  %v109 = vpop.f32.mrb[0].mxu0
  %v110 = vadd.f32 %v48, %v109
  %v111 = vpop.f32.mrb[0].mxu0
  %v112 = vpop.f32.mrb[0].mxu0
  %v113 = vadd.f32 %v48, %v112
  %v114 = vpop.f32.mrb[0].mxu0
  %115 = vmatprep.mubr.bf16.mxu0 0
  %116 = vmatmul.mubr.bf16.gmra.mrb[0].mxu0 %v67
  %v117 = vpop.f32.mrb[0].mxu0
  %v118 = vadd.f32 %v48, %v117
  %v119 = vpop.f32.mrb[0].mxu0
  %v120 = vpop.f32.mrb[0].mxu0
  %v121 = vadd.f32 %v48, %v120
  %v122 = vpop.f32.mrb[0].mxu0
  %123 = vmatprep.mubr.bf16.mxu0 0
  %124 = vmatmul.mubr.bf16.gmra.mrb[0].mxu0 %v70
  %v125 = vpop.f32.mrb[0].mxu0
  %v126 = vadd.f32 %v48, %v125
  %v127 = vpop.f32.mrb[0].mxu0
  %v128 = vpop.f32.mrb[0].mxu0
  %v129 = vadd.f32 %v48, %v128
  %v130 = vpop.f32.mrb[0].mxu0
  %131 = vmatprep.mubr.bf16.mxu0 0
  %132 = vmatmul.mubr.bf16.gmra.mrb[0].mxu0 %v73
  %v133 = vpop.f32.mrb[0].mxu0
  %v134 = vadd.f32 %v48, %v133
  %v135 = vpop.f32.mrb[0].mxu0
  %v136 = vpop.f32.mrb[0].mxu0
  %v137 = vadd.f32 %v48, %v136
  %v138 = vpop.f32.mrb[0].mxu0
  %139 = vdwg.mxu0
  %v140 = vmax.f32 %v110, 0.0
  %v141 = vmax.f32 %v113, 0.0
  %v142 = vmax.f32 %v118, 0.0
  %v143 = vmax.f32 %v121, 0.0
  %v144 = vmax.f32 %v126, 0.0
  %v145 = vmax.f32 %v129, 0.0
  %v146 = vmax.f32 %v134, 0.0
  %v147 = vmax.f32 %v137, 0.0
  %v148 = vpack.c.bf16 %v141, %v140
  %v149 = vpack.c.bf16 %v143, %v142
  %v150 = vpack.c.bf16 %v145, %v144
  %v151 = vpack.c.bf16 %v147, %v146
  %v152 = vld [vmem:[%s3] sm:$0xf]
  %v153 = vld [vmem:[%s3 + $0x4] sm:$0xf]
  %v154 = vld [vmem:[%s3 + $0x8] sm:$0xf]
  %v155 = vld [vmem:[%s3 + $0xc] sm:$0xf]
  %v156 = vld [vmem:[%s3 + $0x10] sm:$0xf]
  %v157 = vld [vmem:[%s3 + $0x14] sm:$0xf]
  %v158 = vld [vmem:[%s3 + $0x18] sm:$0xf]
  %v159 = vld [vmem:[%s3 + $0x1c] sm:$0xf]
  %v160 = vld [vmem:[%s4] sm:$0x1]
  %v162 = vlaneseq
  %v163 = vshrl.u32 %v162, 7
  %v164 = vsub.s32 0, %v163
  %v165 = vrot.slane %v160, %v164
  %v175 = vunpack.c.l.b16 %v152
  %v176 = vunpack.c.l.b16 %v153
  %v177 = vunpack.c.l.b16 %v154
  %v178 = vunpack.c.l.b16 %v155
  %v179 = vunpack.c.l.b16 %v156
  %v180 = vunpack.c.l.b16 %v157
  %v181 = vunpack.c.l.b16 %v158
  %v182 = vunpack.c.l.b16 %v159
  %v183 = vpack.c.b16 %v176, %v175
  %v184 = vpack.c.b16 %v178, %v177
  %v185 = vpack.c.b16 %v180, %v179
  %v186 = vpack.c.b16 %v182, %v181
  %vm191 = vcmask 523264
  %v193 = vsel %vm191, %v148, 0
  %v196 = vsel %vm191, %v149, 0
  %v199 = vsel %vm191, %v150, 0
  %v202 = vsel %vm191, %v151, 0
  %204 = vmatprep.subr.bf16.mxu0 0
  %205 = vmatpush1.bf16.msra.mxu0 %v183
  %206 = vmatprep.subr.bf16.mxu0 0
  %207 = vmatpush1.bf16.msra.mxu0 %v184
  %208 = vmatprep.subr.bf16.mxu0 0
  %209 = vmatpush1.bf16.msra.mxu0 %v185
  %210 = vmatprep.subr.bf16.mxu0 0
  %211 = vmatpush1.bf16.msra.mxu0 %v186
  %212 = vmatprep.subr.bf16.mxu0 0
  %213 = vmatpush1.bf16.msra.mxu0 0
  %214 = vmatprep.subr.bf16.mxu0 0
  %215 = vmatpush1.bf16.msra.mxu0 0
  %216 = vmatprep.subr.bf16.mxu0 0
  %217 = vmatpush1.bf16.msra.mxu0 0
  %218 = vmatprep.subr.bf16.mxu0 0
  %219 = vmatpush1.bf16.msra.mxu0 0
  %220 = vmatprep.subr.bf16.mxu0 0
  %221 = vmatpush1.bf16.msra.mxu0 0
  %222 = vmatprep.subr.bf16.mxu0 0
  %223 = vmatpush1.bf16.msra.mxu0 0
  %224 = vmatprep.subr.bf16.mxu0 0
  %225 = vmatpush1.bf16.msra.mxu0 0
  %226 = vmatprep.subr.bf16.mxu0 0
  %227 = vmatpush1.bf16.msra.mxu0 0
  %228 = vmatprep.subr.bf16.mxu0 0
  %229 = vmatpush1.bf16.msra.mxu0 0
  %230 = vmatprep.subr.bf16.mxu0 0
  %231 = vmatpush1.bf16.msra.mxu0 0
  %232 = vmatprep.subr.bf16.mxu0 0
  %233 = vmatpush1.bf16.msra.mxu0 0
  %234 = vmatprep.subr.bf16.mxu0 0
  %235 = vmatpush1.bf16.msra.mxu0 0
  %236 = vmatprep.mubr.bf16.mxu0 0
  %237 = vmatmul.mubr.bf16.gmra.mrb[0].mxu0 %v193
  %v238 = vpop.f32.mrb[0].mxu0
  %v239 = vadd.f32 %v165, %v238
  %v240 = vpop.f32.mrb[0].mxu0
  %v241 = vpop.f32.mrb[0].mxu0
  %v242 = vadd.f32 %v165, %v241
  %v243 = vpop.f32.mrb[0].mxu0
  %244 = vmatprep.mubr.bf16.mxu0 0
  %245 = vmatmul.mubr.bf16.gmra.mrb[0].mxu0 %v196
  %v246 = vpop.f32.mrb[0].mxu0
  %v247 = vadd.f32 %v165, %v246
  %v248 = vpop.f32.mrb[0].mxu0
  %v249 = vpop.f32.mrb[0].mxu0
  %v250 = vadd.f32 %v165, %v249
  %v251 = vpop.f32.mrb[0].mxu0
  %252 = vmatprep.mubr.bf16.mxu0 0
  %253 = vmatmul.mubr.bf16.gmra.mrb[0].mxu0 %v199
  %v254 = vpop.f32.mrb[0].mxu0
  %v255 = vadd.f32 %v165, %v254
  %v256 = vpop.f32.mrb[0].mxu0
  %v257 = vpop.f32.mrb[0].mxu0
  %v258 = vadd.f32 %v165, %v257
  %v259 = vpop.f32.mrb[0].mxu0
  %260 = vmatprep.mubr.bf16.mxu0 0
  %261 = vmatmul.mubr.bf16.gmra.mrb[0].mxu0 %v202
  %v262 = vpop.f32.mrb[0].mxu0
  %v263 = vadd.f32 %v165, %v262
  %v264 = vpop.f32.mrb[0].mxu0
  %v265 = vpop.f32.mrb[0].mxu0
  %v266 = vadd.f32 %v165, %v265
  %v267 = vpop.f32.mrb[0].mxu0
  %268 = vdwg.mxu0
  %v269 = vmax.f32 %v239, 0.0
  %v270 = vmax.f32 %v242, 0.0
  %v271 = vmax.f32 %v247, 0.0
  %v272 = vmax.f32 %v250, 0.0
  %v273 = vmax.f32 %v255, 0.0
  %v274 = vmax.f32 %v258, 0.0
  %v275 = vmax.f32 %v263, 0.0
  %v276 = vmax.f32 %v266, 0.0
  %v277 = vpack.c.bf16 %v270, %v269
  %v278 = vpack.c.bf16 %v272, %v271
  %v279 = vpack.c.bf16 %v274, %v273
  %v280 = vpack.c.bf16 %v276, %v275
  %v281 = vld [vmem:[%s5] sm:$0xf]
  %v282 = vld [vmem:[%s5 + $0x4] sm:$0xf]
  %v283 = vld [vmem:[%s5 + $0x8] sm:$0xf]
  %v284 = vld [vmem:[%s5 + $0xc] sm:$0xf]
  %v285 = vld [vmem:[%s6] sm:$0x1]
  %v287 = vlaneseq
  %v288 = vshrl.u32 %v287, 7
  %v289 = vsub.s32 0, %v288
  %v290 = vrot.slane %v285, %v289
  %v296 = vunpack.c.l.b16 %v281
  %v297 = vunpack.c.l.b16 %v282
  %v298 = vunpack.c.l.b16 %v283
  %v299 = vunpack.c.l.b16 %v284
  %v300 = vpack.c.b16 %v297, %v296
  %v301 = vpack.c.b16 %v299, %v298
  %v305 = vsel %vm62, %v277, 0
  %v308 = vsel %vm62, %v278, 0
  %v311 = vsel %vm62, %v279, 0
  %v314 = vsel %vm62, %v280, 0
  %316 = vmatprep.subr.bf16.mxu0 0
  %317 = vmatpush1.bf16.msra.mxu0 %v300
  %318 = vmatprep.subr.bf16.mxu0 0
  %319 = vmatpush1.bf16.msra.mxu0 %v301
  %320 = vmatprep.subr.bf16.mxu0 0
  %321 = vmatpush1.bf16.msra.mxu0 0
  %322 = vmatprep.subr.bf16.mxu0 0
  %323 = vmatpush1.bf16.msra.mxu0 0
  %324 = vmatprep.subr.bf16.mxu0 0
  %325 = vmatpush1.bf16.msra.mxu0 0
  %326 = vmatprep.subr.bf16.mxu0 0
  %327 = vmatpush1.bf16.msra.mxu0 0
  %328 = vmatprep.subr.bf16.mxu0 0
  %329 = vmatpush1.bf16.msra.mxu0 0
  %330 = vmatprep.subr.bf16.mxu0 0
  %331 = vmatpush1.bf16.msra.mxu0 0
  %332 = vmatprep.subr.bf16.mxu0 0
  %333 = vmatpush1.bf16.msra.mxu0 0
  %334 = vmatprep.subr.bf16.mxu0 0
  %335 = vmatpush1.bf16.msra.mxu0 0
  %336 = vmatprep.subr.bf16.mxu0 0
  %337 = vmatpush1.bf16.msra.mxu0 0
  %338 = vmatprep.subr.bf16.mxu0 0
  %339 = vmatpush1.bf16.msra.mxu0 0
  %340 = vmatprep.subr.bf16.mxu0 0
  %341 = vmatpush1.bf16.msra.mxu0 0
  %342 = vmatprep.subr.bf16.mxu0 0
  %343 = vmatpush1.bf16.msra.mxu0 0
  %344 = vmatprep.subr.bf16.mxu0 0
  %345 = vmatpush1.bf16.msra.mxu0 0
  %346 = vmatprep.subr.bf16.mxu0 0
  %347 = vmatpush1.bf16.msra.mxu0 0
  %348 = vmatprep.mubr.bf16.mxu0 0
  %349 = vmatmul.mubr.bf16.gmra.mrb[0].mxu0 %v305
  %v350 = vpop.f32.mrb[0].mxu0
  %v351 = vadd.f32 %v290, %v350
  %v352 = vpop.f32.mrb[0].mxu0
  %v353 = vpop.f32.mrb[0].mxu0
  %v354 = vadd.f32 %v290, %v353
  %v355 = vpop.f32.mrb[0].mxu0
  %356 = vmatprep.mubr.bf16.mxu0 0
  %357 = vmatmul.mubr.bf16.gmra.mrb[0].mxu0 %v308
  %v358 = vpop.f32.mrb[0].mxu0
  %v359 = vadd.f32 %v290, %v358
  %v360 = vpop.f32.mrb[0].mxu0
  %v361 = vpop.f32.mrb[0].mxu0
  %v362 = vadd.f32 %v290, %v361
  %v363 = vpop.f32.mrb[0].mxu0
  %364 = vmatprep.mubr.bf16.mxu0 0
  %365 = vmatmul.mubr.bf16.gmra.mrb[0].mxu0 %v311
  %v366 = vpop.f32.mrb[0].mxu0
  %v367 = vadd.f32 %v290, %v366
  %v368 = vpop.f32.mrb[0].mxu0
  %v369 = vpop.f32.mrb[0].mxu0
  %v370 = vadd.f32 %v290, %v369
  %v371 = vpop.f32.mrb[0].mxu0
  %372 = vmatprep.mubr.bf16.mxu0 0
  %373 = vmatmul.mubr.bf16.gmra.mrb[0].mxu0 %v314
  %v374 = vpop.f32.mrb[0].mxu0
  %v375 = vadd.f32 %v290, %v374
  %v376 = vpop.f32.mrb[0].mxu0
  %v377 = vpop.f32.mrb[0].mxu0
  %v378 = vadd.f32 %v290, %v377
  %v379 = vpop.f32.mrb[0].mxu0
  %380 = vdwg.mxu0
  %vm381 = vcmask 64512
  %v382 = vsel %vm381, %v351, -inf
  %383 = vmax.xlane.f32.xlu0 %v382
  %v384 = vpop.xlane.xlu0 %383
  %v385 = vsel %vm381, %v354, -inf
  %386 = vmax.xlane.f32.xlu0 %v385
  %v387 = vpop.xlane.xlu0 %386
  %v388 = vsel %vm381, %v359, -inf
  %389 = vmax.xlane.f32.xlu0 %v388
  %v390 = vpop.xlane.xlu0 %389
  %v391 = vsel %vm381, %v362, -inf
  %392 = vmax.xlane.f32.xlu0 %v391
  %v393 = vpop.xlane.xlu0 %392
  %v394 = vsel %vm381, %v367, -inf
  %395 = vmax.xlane.f32.xlu0 %v394
  %v396 = vpop.xlane.xlu0 %395
  %v397 = vsel %vm381, %v370, -inf
  %398 = vmax.xlane.f32.xlu0 %v397
  %v399 = vpop.xlane.xlu0 %398
  %v400 = vsel %vm381, %v375, -inf
  %401 = vmax.xlane.f32.xlu0 %v400
  %v402 = vpop.xlane.xlu0 %401
  %v403 = vsel %vm381, %v378, -inf
  %404 = vmax.xlane.f32.xlu0 %v403
  %v405 = vpop.xlane.xlu0 %404
  %v406 = vsub.f32 %v351, %v384
  %v407 = vsub.f32 %v354, %v387
  %v408 = vsub.f32 %v359, %v390
  %v409 = vsub.f32 %v362, %v393
  %v410 = vsub.f32 %v367, %v396
  %v411 = vsub.f32 %v370, %v399
  %v412 = vsub.f32 %v375, %v402
  %v413 = vsub.f32 %v378, %v405
  %v414 = vmul.f32 %v406, 1.442695
  %v415 = vpow.pop %v414
  %v416 = vmul.f32 %v407, 1.442695
  %v417 = vpow.pop %v416
  %v418 = vmul.f32 %v408, 1.442695
  %v419 = vpow.pop %v418
  %v420 = vmul.f32 %v409, 1.442695
  %v421 = vpow.pop %v420
  %v422 = vmul.f32 %v410, 1.442695
  %v423 = vpow.pop %v422
  %v424 = vmul.f32 %v411, 1.442695
  %v425 = vpow.pop %v424
  %v426 = vmul.f32 %v412, 1.442695
  %v427 = vpow.pop %v426
  %v428 = vmul.f32 %v413, 1.442695
  %v429 = vpow.pop %v428
  %v430 = vsel %vm381, %v415, 0.0
  %431 = vadd.xlane.f32.xlu0 %v430
  %v432 = vpop.xlane.xlu0 %431
  %v433 = vsel %vm381, %v417, 0.0
  %434 = vadd.xlane.f32.xlu0 %v433
  %v435 = vpop.xlane.xlu0 %434
  %v436 = vsel %vm381, %v419, 0.0
  %437 = vadd.xlane.f32.xlu0 %v436
  %v438 = vpop.xlane.xlu0 %437
  %v439 = vsel %vm381, %v421, 0.0
  %440 = vadd.xlane.f32.xlu0 %v439
  %v441 = vpop.xlane.xlu0 %440
  %v442 = vsel %vm381, %v423, 0.0
  %443 = vadd.xlane.f32.xlu0 %v442
  %v444 = vpop.xlane.xlu0 %443
  %v445 = vsel %vm381, %v425, 0.0
  %446 = vadd.xlane.f32.xlu0 %v445
  %v447 = vpop.xlane.xlu0 %446
  %v448 = vsel %vm381, %v427, 0.0
  %449 = vadd.xlane.f32.xlu0 %v448
  %v450 = vpop.xlane.xlu0 %449
  %v451 = vsel %vm381, %v429, 0.0
  %452 = vadd.xlane.f32.xlu0 %v451
  %v453 = vpop.xlane.xlu0 %452
  %v454 = vrcp.pop %v432
  %v455 = vmul.f32 %v415, %v454
  %v456 = vrcp.pop %v435
  %v457 = vmul.f32 %v417, %v456
  %v458 = vrcp.pop %v438
  %v459 = vmul.f32 %v419, %v458
  %v460 = vrcp.pop %v441
  %v461 = vmul.f32 %v421, %v460
  %v462 = vrcp.pop %v444
  %v463 = vmul.f32 %v423, %v462
  %v464 = vrcp.pop %v447
  %v465 = vmul.f32 %v425, %v464
  %v466 = vrcp.pop %v450
  %v467 = vmul.f32 %v427, %v466
  %v468 = vrcp.pop %v453
  %v469 = vmul.f32 %v429, %v468
  %470 = vst.msk [vmem:[%s7] sm:$0xff] %vm381, %v455
  %471 = vst.msk [vmem:[%s7 + $0x8] sm:$0xff] %vm381, %v457
  %472 = vst.msk [vmem:[%s7 + $0x10] sm:$0xff] %vm381, %v459
  %473 = vst.msk [vmem:[%s7 + $0x18] sm:$0xff] %vm381, %v461
  %474 = vst.msk [vmem:[%s7 + $0x20] sm:$0xff] %vm381, %v463
  %475 = vst.msk [vmem:[%s7 + $0x28] sm:$0xff] %vm381, %v465
  %476 = vst.msk [vmem:[%s7 + $0x30] sm:$0xff] %vm381, %v467
  %477 = vst.msk [vmem:[%s7 + $0x38] sm:$0xff] %vm381, %v469
  // Predicated region
  $region30: #{tpu_custom_call.1} parent=0 // pred_check
    _
  $region31: #{tpu_custom_call.1} parent=0 // pred_check_branch
    %479 = sbr.rel (0) target = $region33
  $region32: #{tpu_custom_call.1} parent=0 // pred_region
    _
  $region33: #{tpu_custom_call.1} parent=0 // pred_fallthru
    _
  // Predicated region
  $region34: #{tpu_custom_call.1} parent=0 // pred_check
    _
  $region35: #{tpu_custom_call.1} parent=0 // pred_check_branch
    %481 = sbr.rel (0) target = $region37
  $region36: #{tpu_custom_call.1} parent=0 // pred_region
    _
  $region37: #{tpu_custom_call.1} parent=0 // pred_fallthru
    _

</llo_original>
